<compile_context>
chip_gen: v5e
topology: v5e:2x2
jax: 0.10.0
libtpu: 0.0.40
codegen_flags: <defaults>
</compile_context>

<pallas_src>
import functools

import jax
import jax.numpy as jnp
from jax import lax
from jax.experimental import pallas as pl
from jax.experimental.pallas import tpu as pltpu


def _round_up(x, m):
    return ((x + m - 1) // m) * m


def _cdiv(a, b):
    return -(-a // b)


def _vmem_caps():
    """Returns (physical VMEM bytes, budget for explicit kernel buffers)."""
    cap = 64 * 1024 * 1024  # conservative default = v7x per-TC VMEM
    try:
        info = pltpu.get_tpu_info()
        cap = int(getattr(info, "vmem_capacity_bytes", cap) or cap)
    except Exception:
        pass
    # ~70% of physical for our double-buffered tiles; headroom for compiler
    # internal scratch / semaphores.  v7x (64 MiB) -> ~45 MiB, v5e/v6e
    # (128 MiB) -> ~90 MiB.
    budget = min(int(cap * 0.7), 96 * 1024 * 1024)
    return cap, budget


def _choose_tiles(M, N, K, budget):
    """Pick (tm, tn, tk) so double-buffered x/W + resident out + bias fit budget.

    Prefers a single full-K tile (no carried reduction, W streamed once),
    shrinking N first, then K, with even 128-granule splits so worst-case
    padding is bounded by one granule per axis.  Axes fully covered by one
    tile use the exact (unpadded) dimension so no wrapper pad is needed.
    """
    itemsize = 4  # f32 compute
    Mg = _round_up(M, 8)
    Ng = _round_up(N, 128)
    Kg = _round_up(K, 128)

    tm = min(Mg, 256)

    def bytes_needed(tn, tk):
        # x (2 bufs) + W (2 bufs) + out (1 buf, resident over K) + bias (2 bufs)
        return (2 * tm * tk + 2 * tn * tk + tm * tn + 2 * tn) * itemsize

    def even_split(total, parts, granule):
        return _round_up(_cdiv(total, parts), granule)

    tn, tk = Ng, Kg
    s = 1
    while bytes_needed(tn, tk) > budget and tn > 128:
        s += 1
        tn = even_split(Ng, s, 128)
    s = 1
    while bytes_needed(tn, tk) > budget and tk > 128:
        s += 1
        tk = even_split(Kg, s, 128)

    # v7x megacore: a single M tile with a single N tile would leave one
    # TensorCore idle; give the N axis >= 2 tiles when it is big enough.
    if Mg <= tm and Ng >= 256 and tn >= Ng:
        tn = even_split(Ng, 2, 128)

    # Use exact dims when one tile spans the whole axis (Pallas allows
    # block == full array dim) -> no wrapper-side padding for that axis.
    tm_out = M if Mg <= tm else tm
    tn_out = N if tn >= Ng else tn
    tk_out = K if tk >= Kg else tk
    return tm_out, tn_out, tk_out


def _linear_kernel(x_ref, w_ref, b_ref, o_ref):
    """One (tm, tn) output tile, accumulated directly in o_ref over the K axis.

    x_ref : (tm, tk) activations
    w_ref : (tn, tk) weight tile in PyTorch (out, in) layout (NT contraction)
    b_ref : (1,  tn) bias tile
    o_ref : (tm, tn) f32 output tile; VMEM-resident across K (block index
            ignores k) so it doubles as the accumulator -- no scratch needed.
    """
    k = pl.program_id(2)

    part = lax.dot_general(
        x_ref[...], w_ref[...],
        dimension_numbers=(((1,), (1,)), ((), ())),
        preferred_element_type=jnp.float32,
    )

    @pl.when(k == 0)
    def _():
        o_ref[...] = part + b_ref[...]

    @pl.when(k > 0)
    def _():
        o_ref[...] = o_ref[...] + part


@functools.partial(jax.jit, static_argnames=("tm", "tn", "tk", "vmem_limit"))
def _linear_impl(x, weight, bias, *, tm, tn, tk, vmem_limit):
    B, K = x.shape
    N = weight.shape[0]

    Mp = B if tm == B else _round_up(B, tm)
    Np = N if tn == N else _round_up(N, tn)
    Kp = K if tk == K else _round_up(K, tk)

    # Pad only when a pad is actually nonzero (zero-pad of K keeps the
    # contraction exact; N/M pads are sliced off below).
    x_p = x if (Mp == B and Kp == K) else jnp.pad(x, ((0, Mp - B), (0, Kp - K)))
    w_p = weight if (Np == N and Kp == K) else jnp.pad(
        weight, ((0, Np - N), (0, Kp - K)))
    b_p = bias if Np == N else jnp.pad(bias, (0, Np - N))
    b_p = b_p.reshape(1, Np)

    grid = (Mp // tm, Np // tn, Kp // tk)  # K last: carried reduction axis

    y_p = pl.pallas_call(
        _linear_kernel,
        out_shape=jax.ShapeDtypeStruct((Mp, Np), jnp.float32),
        grid_spec=pltpu.PrefetchScalarGridSpec(
            num_scalar_prefetch=0,
            grid=grid,
            in_specs=[
                pl.BlockSpec((tm, tk), lambda i, j, k: (i, k)),   # x
                pl.BlockSpec((tn, tk), lambda i, j, k: (j, k)),   # W (out, in)
                pl.BlockSpec((1, tn), lambda i, j, k: (0, j)),    # bias
            ],
            out_specs=pl.BlockSpec((tm, tn), lambda i, j, k: (i, j)),
        ),
        compiler_params=pltpu.CompilerParams(
            dimension_semantics=("parallel", "parallel", "arbitrary"),
            vmem_limit_bytes=vmem_limit,
        ),
    )(x_p, w_p, b_p)

    y = y_p[:B, :N]
    if y.dtype != x.dtype:
        y = y.astype(x.dtype)
    return y


def linear_pallas(x, weight, bias):
    """y = x @ weight.T + bias  (PyTorch nn.Linear semantics).

    x:      (B, in_features)
    weight: (out_features, in_features)  -- PyTorch layout, used as-is
    bias:   (out_features,)
    """
    B, K = x.shape
    N, Kw = weight.shape
    assert K == Kw, (K, Kw)

    cap, budget = _vmem_caps()
    tm, tn, tk = _choose_tiles(B, N, K, budget)

    buf_bytes = (2 * tm * tk + 2 * tn * tk + tm * tn + 2 * tn) * 4
    vmem_limit = int(min(cap, max(32 * 1024 * 1024, buf_bytes + (8 << 20))))

    return _linear_impl(x, weight, bias, tm=tm, tn=tn, tk=tk,
                        vmem_limit=vmem_limit)


def init_c1_params(key, in_features, out_features, dtype=jnp.float32):
    """Deterministic init mimicking nn.Linear's uniform(-1/sqrt(in), 1/sqrt(in))."""
    kw, kb = jax.random.split(key)
    bound = 1.0 / float(in_features) ** 0.5
    weight = jax.random.uniform(
        kw, (out_features, in_features), dtype, minval=-bound, maxval=bound)
    bias = jax.random.uniform(
        kb, (out_features,), dtype, minval=-bound, maxval=bound)
    return weight, bias


if __name__ == "__main__":
    key = jax.random.PRNGKey(0)
    k_x, k_p = jax.random.split(key)

    batch = 16
    in_features = 128
    out_features = 256

    x = jax.random.normal(k_x, (batch, in_features), dtype=jnp.float32)
    weight, bias = init_c1_params(k_p, in_features, out_features)

    y = jax.block_until_ready(linear_pallas(x, weight, bias))

    # Correctness check against a high-precision JAX reference of nn.Linear.
    y_ref = jnp.dot(x, weight.T, precision=jax.lax.Precision.HIGHEST) + bias
    assert y.shape == (batch, out_features)
    max_err = float(jnp.max(jnp.abs(y - y_ref)))
    assert jnp.allclose(y, y_ref, atol=2e-3, rtol=2e-3), max_err

    print("KERNEL_OK")
</pallas_src>

<mosaic_0001>
module attributes {stable_mosaic.version = 11 : i64} {
  func.func @_linear_kernel(%arg0: i32, %arg1: i32, %arg2: i32, %arg3: memref<16x128xf32, #tpu.memory_space<vmem>>, %arg4: memref<128x128xf32, #tpu.memory_space<vmem>>, %arg5: memref<1x128xf32, #tpu.memory_space<vmem>>, %arg6: memref<16x128xf32, #tpu.memory_space<vmem>>) attributes {dimension_semantics = [#tpu.dimension_semantics<parallel>, #tpu.dimension_semantics<parallel>, #tpu.dimension_semantics<arbitrary>], iteration_bounds = array<i64: 1, 2, 1>, scalar_prefetch = 0 : i64, scratch_operands = 0 : i64, tpu.core_type = #tpu.core_type<tc>, window_params = [{transform_indices = @transform_0, window_bounds = array<i64: 16, 128>}, {transform_indices = @transform_1, window_bounds = array<i64: 128, 128>}, {transform_indices = @transform_2, window_bounds = array<i64: 1, 128>}, {transform_indices = @transform_3, window_bounds = array<i64: 16, 128>}]} {
    %c0 = arith.constant 0 : index
    %c0_0 = arith.constant 0 : index
    %0 = vector.load %arg3[%c0, %c0_0] : memref<16x128xf32, #tpu.memory_space<vmem>>, vector<16x128xf32>
    %c0_1 = arith.constant 0 : index
    %c0_2 = arith.constant 0 : index
    %1 = vector.load %arg4[%c0_1, %c0_2] : memref<128x128xf32, #tpu.memory_space<vmem>>, vector<128x128xf32>
    %cst = arith.constant dense<0.000000e+00> : vector<16x128xf32>
    %2 = tpu.matmul %0, %1, %cst {dimension_numbers = #tpu.dot_dimension_numbers<[1], [1], [0], [0], [0, 0, 1, 0], [], []>} : vector<16x128xf32>, vector<128x128xf32>, vector<16x128xf32> -> vector<16x128xf32>
    %c0_i32 = arith.constant 0 : i32
    %3 = arith.cmpi eq, %arg2, %c0_i32 : i32
    %4 = arith.extui %3 : i1 to i32
    %c0_i32_3 = arith.constant 0 : i32
    %5 = arith.cmpi ne, %4, %c0_i32_3 : i32
    scf.if %5 {
      %c0_6 = arith.constant 0 : index
      %c0_7 = arith.constant 0 : index
      %9 = vector.load %arg5[%c0_6, %c0_7] : memref<1x128xf32, #tpu.memory_space<vmem>>, vector<1x128xf32>
      %10 = vector.broadcast %9 : vector<1x128xf32> to vector<16x128xf32>
      %11 = arith.addf %2, %10 : vector<16x128xf32>
      %c0_8 = arith.constant 0 : index
      %c0_9 = arith.constant 0 : index
      %12 = vector.load %arg6[%c0_8, %c0_9] : memref<16x128xf32, #tpu.memory_space<vmem>>, vector<16x128xf32>
      tpu.vector_store %arg6[%c0_8, %c0_9], %11 {strides = array<i32>} : memref<16x128xf32, #tpu.memory_space<vmem>>, vector<16x128xf32>,
    } else {
    }
    %c0_i32_4 = arith.constant 0 : i32
    %6 = arith.cmpi sgt, %arg2, %c0_i32_4 : i32
    %7 = arith.extui %6 : i1 to i32
    %c0_i32_5 = arith.constant 0 : i32
    %8 = arith.cmpi ne, %7, %c0_i32_5 : i32
    scf.if %8 {
      %c0_6 = arith.constant 0 : index
      %c0_7 = arith.constant 0 : index
      %9 = vector.load %arg6[%c0_6, %c0_7] : memref<16x128xf32, #tpu.memory_space<vmem>>, vector<16x128xf32>
      %10 = arith.addf %9, %2 : vector<16x128xf32>
      %c0_8 = arith.constant 0 : index
      %c0_9 = arith.constant 0 : index
      %11 = vector.load %arg6[%c0_8, %c0_9] : memref<16x128xf32, #tpu.memory_space<vmem>>, vector<16x128xf32>
      tpu.vector_store %arg6[%c0_8, %c0_9], %10 {strides = array<i32>} : memref<16x128xf32, #tpu.memory_space<vmem>>, vector<16x128xf32>,
    } else {
    }
    return
  }
  func.func @transform_0(%arg0: i32, %arg1: i32, %arg2: i32) -> (i32, i32) {
    %c0_i32 = arith.constant 0 : i32
    return %arg0, %arg2 : i32, i32
  }
  func.func @transform_1(%arg0: i32, %arg1: i32, %arg2: i32) -> (i32, i32) {
    %c0_i32 = arith.constant 0 : i32
    return %arg1, %arg2 : i32, i32
  }
  func.func @transform_2(%arg0: i32, %arg1: i32, %arg2: i32) -> (i32, i32) {
    %c0_i32 = arith.constant 0 : i32
    %c0_i32_0 = arith.constant 0 : i32
    return %c0_i32, %arg1 : i32, i32
  }
  func.func @transform_3(%arg0: i32, %arg1: i32, %arg2: i32) -> (i32, i32) {
    %c0_i32 = arith.constant 0 : i32
    return %arg0, %arg1 : i32, i32
  }
}

</mosaic_0001>

<llo_original>
// kernel: _linear_impl.1
$region0: #{_linear_impl.1}
  #allocation0 [shape = 'u32[]', space=smem, size = 0x4, offset = 0x4, fixed_abs, tag = 'smem constant byte address 0x4 - core index']
  #allocation1 [shape = 'u32[72,128]{1,0:T(1,128)}', space=vmem, size = 0x9000, scoped, tag = 'internal scratch']
  %s0 = inlined_call_operand.hbm [shape: f32[16,128], index: 0, kind: input, shape index: {}]
  %s1 = inlined_call_operand.hbm [shape: f32[256,128], index: 1, kind: input, shape index: {}]
  %s2 = inlined_call_operand.vmem [shape: f32[1,256], index: 2, kind: input, shape index: {}]
  %s3 = inlined_call_operand.hbm [shape: f32[16,256], index: 3, kind: output, shape index: {}]
  %s4 = sld [smem:[#allocation0]]
  $region61: #{_linear_impl.1} parent=0
    _
  %s6 = ssub.s32 1, %s4
  %s7 = scalar_select 0, %s6, %s4
  $region1: #{_linear_impl.1} parent=0
    #allocation2 [shape = 'u8[8192]{0}', space=vmem, size = 0x2000, scoped, tag = 'input window, operand 0, single buffered']
    #allocation3 [shape = 's32[2]{0}', space=sflag, size = 0x8, scoped, tag = 'scoped memory for _linear_impl.1']
    #allocation4 [shape = 's32[2]{0}', space=sflag, size = 0x8, scoped, tag = 'scoped memory for _linear_impl.1']
    #allocation5 [shape = 'u8[131072]{0}', space=vmem, size = 0x20000, scoped, tag = 'input window, operand 1']
    #allocation6 [shape = 's32[2]{0}', space=sflag, size = 0x8, scoped, tag = 'scoped memory for _linear_impl.1']
    #allocation7 [shape = 'u8[16384]{0}', space=vmem, size = 0x4000, scoped, tag = 'output window, operand 0']
    %8 = vsyncpa [#allocation3], 0
    %9 = vsyncpa [#allocation6], 0
    %s10 = scalar_lea.sflag [#allocation6], 1
    %11 = vsyncpa %s10, 0
    %12 = vsyncpa [#allocation4], 0
    %s13 = scalar_lea.sflag [#allocation4], 1
    %14 = vsyncpa %s13, 0
    loop: start=0, step=1, limit=4
    $region2: #{_linear_impl.1} parent=1 // loop_pre_header
      _
    $region3: #{_linear_impl.1} parent=1 // loop_header
      %s16 = sphi 0, %s20
      %p17 = scmp.ge.s32.totalorder %s16, 4
      %s23 = sphi 0, %s42
      %s24 = sphi 0, %s38
      %s25 = sphi 0, %s34
      %s26 = sphi 0, %s23
      %s27 = sphi 0, %s24
      %s28 = sphi 0, %s25
      %s29 = sphi 0, %s26
      %s30 = sphi 0, %s27
      %s31 = sphi 0, %s28
      %s47 = sphi 0, %s49
      %s50 = sphi 0, %s47
      %s51 = sphi 0, %s50
      %s67 = sphi 0, %s51
      %s75 = sphi 0, %s77
      %s78 = sphi 0, %s75
      %s79 = sphi 0, %s78
      %s95 = sphi 0, %s79
      %s101 = sphi 0, %s103
      %s104 = sphi 0, %s101
      %s105 = sphi 0, %s104
      %s121 = sphi 0, %s105
      %s129 = sphi 0, %s131
      %s132 = sphi 0, %s129
      %s133 = sphi 0, %s132
      %s149 = sphi 0, %s133
    $region4: #{_linear_impl.1} parent=1 // loop_header_branch
      %19 = sbr.rel (%p17) target = $region8
    $region5: #{_linear_impl.1} parent=1 // loop_body
      %s21 = ssub.s32 %s16, 1
      %s22 = ssub.s32 %s16, 2
      %s32 = sadd.s32 1, %s25
      %p33 = scmp.ge.s32.totalorder %s32, 1
      %s34 = scalar_select %p33, 0, %s32
      %s35 = sadd.s32 1, %s24
      %s36 = scalar_select %p33, %s35, %s24
      %p37 = scmp.ge.s32.totalorder %s36, 2
      %s38 = scalar_select %p37, 0, %s36
      %s39 = sadd.s32 1, %s23
      %s40 = scalar_select %p37, %s39, %s23
      %p41 = scmp.ge.s32.totalorder %s40, 1
      %s42 = scalar_select %p41, 0, %s40
      %s43 = ssub.s32 %s23, %s42
      %s44 = ssub.s32 %s25, %s34
      %s45 = sor.u32 %s43, %s44
      %p46 = scmp.eq.s32.totalorder %s45, 0
      %s48 = sadd.s32 %s47, 1
      %s49 = scalar_select %p46, %s47, %s48
      %p52 = pneg %p46
      %p53 = scmp.eq.s32.totalorder %s16, 1
      %p54 = por %p52, %p53
      %p55 = scmp.ne.s32.totalorder %s47, %s50
      %p56 = scmp.eq.s32.totalorder %s16, 0
      %p57 = por %p55, %p56
      %p58 = scmp.ne.s32.totalorder %s47, %s50
      %p59 = scmp.eq.s32.totalorder %s21, 1
      %p60 = por %p58, %p59
      %p61 = scmp.ne.s32.totalorder %s50, %s51
      %p62 = scmp.eq.s32.totalorder %s21, 0
      %p63 = por %p61, %p62
      %p64 = scmp.ne.s32.totalorder %s50, %s51
      %p65 = scmp.eq.s32.totalorder %s22, 1
      %p66 = por %p64, %p65
      %p68 = scmp.ne.s32.totalorder %s51, %s67
      %p69 = scmp.eq.s32.totalorder %s22, 0
      %p70 = por %p68, %p69
      %s71 = ssub.s32 %s24, %s38
      %s72 = ssub.s32 %s25, %s34
      %s73 = sor.u32 %s71, %s72
      %p74 = scmp.eq.s32.totalorder %s73, 0
      %s76 = sadd.s32 %s75, 1
      %s77 = scalar_select %p74, %s75, %s76
      %p80 = pneg %p74
      %p81 = scmp.eq.s32.totalorder %s16, 1
      %p82 = por %p80, %p81
      %p83 = scmp.ne.s32.totalorder %s75, %s78
      %p84 = scmp.eq.s32.totalorder %s16, 0
      %p85 = por %p83, %p84
      %p86 = scmp.ne.s32.totalorder %s75, %s78
      %p87 = scmp.eq.s32.totalorder %s21, 1
      %p88 = por %p86, %p87
      %p89 = scmp.ne.s32.totalorder %s78, %s79
      %p90 = scmp.eq.s32.totalorder %s21, 0
      %p91 = por %p89, %p90
      %p92 = scmp.ne.s32.totalorder %s78, %s79
      %p93 = scmp.eq.s32.totalorder %s22, 1
      %p94 = por %p92, %p93
      %p96 = scmp.ne.s32.totalorder %s79, %s95
      %p97 = scmp.eq.s32.totalorder %s22, 0
      %p98 = por %p96, %p97
      %s99 = ssub.s32 %s24, %s38
      %p100 = scmp.eq.s32.totalorder %s99, 0
      %s102 = sadd.s32 %s101, 1
      %s103 = scalar_select %p100, %s101, %s102
      %p106 = pneg %p100
      %p107 = scmp.eq.s32.totalorder %s16, 1
      %p108 = por %p106, %p107
      %p109 = scmp.ne.s32.totalorder %s101, %s104
      %p110 = scmp.eq.s32.totalorder %s16, 0
      %p111 = por %p109, %p110
      %p112 = scmp.ne.s32.totalorder %s101, %s104
      %p113 = scmp.eq.s32.totalorder %s21, 1
      %p114 = por %p112, %p113
      %p115 = scmp.ne.s32.totalorder %s104, %s105
      %p116 = scmp.eq.s32.totalorder %s21, 0
      %p117 = por %p115, %p116
      %p118 = scmp.ne.s32.totalorder %s104, %s105
      %p119 = scmp.eq.s32.totalorder %s22, 1
      %p120 = por %p118, %p119
      %p122 = scmp.ne.s32.totalorder %s105, %s121
      %p123 = scmp.eq.s32.totalorder %s22, 0
      %p124 = por %p122, %p123
      %s125 = ssub.s32 %s23, %s42
      %s126 = ssub.s32 %s24, %s38
      %s127 = sor.u32 %s125, %s126
      %p128 = scmp.eq.s32.totalorder %s127, 0
      %s130 = sadd.s32 %s129, 1
      %s131 = scalar_select %p128, %s129, %s130
      %p134 = pneg %p128
      %p135 = scmp.eq.s32.totalorder %s16, 1
      %p136 = por %p134, %p135
      %p137 = scmp.ne.s32.totalorder %s129, %s132
      %p138 = scmp.eq.s32.totalorder %s16, 0
      %p139 = por %p137, %p138
      %p140 = scmp.ne.s32.totalorder %s129, %s132
      %p141 = scmp.eq.s32.totalorder %s21, 1
      %p142 = por %p140, %p141
      %p143 = scmp.ne.s32.totalorder %s132, %s133
      %p144 = scmp.eq.s32.totalorder %s21, 0
      %p145 = por %p143, %p144
      %p146 = scmp.ne.s32.totalorder %s132, %s133
      %p147 = scmp.eq.s32.totalorder %s22, 1
      %p148 = por %p146, %p147
      %p150 = scmp.ne.s32.totalorder %s133, %s149
      %p151 = scmp.eq.s32.totalorder %s22, 0
      %p152 = por %p150, %p151
      %p153 = scmp.le.s32.totalorder 1, %s16
      %p154 = scmp.lt.s32.totalorder %s16, 3
      %p155 = pnand %p153, %p154
      %p156 = pneg %p155
      // Predicated region
      $region9: #{_linear_impl.1} parent=5 // pred_check
        _
      $region10: #{_linear_impl.1} parent=5 // pred_check_branch
        %158 = sbr.rel (%p155) target = $region12
      $region11: #{_linear_impl.1} parent=5 // pred_region
        %s159 = ssub.s32 %s16, 1
        // Predicated region
        $region13: #{_linear_impl.1} parent=11 // pred_check
          %p160 = pneg %p63
        $region14: #{_linear_impl.1} parent=11 // pred_check_branch
          %162 = sbr.rel (%p160) target = $region16
        $region15: #{_linear_impl.1} parent=11 // pred_region
          %s163 = smul.u32 2, %s26
          %165 = vsyncadd [#allocation3], 0
          %s166 = sadd.s32 %s28, %s163
          %s167 = smul.addr %s166, 8
          %s168 = scalar_lea.hbm %s0, %s167
          %s169 = sshll.u32 %s168, 4
          %s170 = int_to_ptr.hbm [resolvable:$true] %s169
          %s171 = sshll.u32 [#allocation2], 4
          %s172 = int_to_ptr.vmem [resolvable:$true] %s171
          %177 = dma.hbm_to_vmem [thread:$0]  %s170, 256, %s172, [#allocation3], 128, 128, 8
        $region16: #{_linear_impl.1} parent=11 // pred_fallthru
          _
      $region12: #{_linear_impl.1} parent=5 // pred_fallthru
        _
      %p178 = scmp.lt.s32.totalorder %s16, 2
      // Predicated region
      $region17: #{_linear_impl.1} parent=5 // pred_check
        %p179 = pneg %p178
      $region18: #{_linear_impl.1} parent=5 // pred_check_branch
        %181 = sbr.rel (%p179) target = $region20
      $region19: #{_linear_impl.1} parent=5 // pred_region
        // Predicated region
        $region21: #{_linear_impl.1} parent=19 // pred_check
          %p182 = pneg %p85
        $region22: #{_linear_impl.1} parent=19 // pred_check_branch
          %184 = sbr.rel (%p182) target = $region24
        $region23: #{_linear_impl.1} parent=19 // pred_region
          %s185 = sand.u32 %s75, 1
          %s186 = scalar_lea.sflag [#allocation6], %s185
          %s187 = sand.u32 %s75, 1
          %s188 = smul.addr %s187, 128
          %s189 = scalar_lea.vmem [#allocation5], %s188
          %s190 = smul.u32 16, %s24
          %192 = vsyncadd %s186, 0
          %s193 = sadd.s32 %s25, %s190
          %s194 = smul.addr %s193, 8
          %s195 = scalar_lea.hbm %s1, %s194
          %s196 = sshll.u32 %s195, 4
          %s197 = int_to_ptr.hbm [resolvable:$true] %s196
          %s198 = sshll.u32 %s189, 4
          %s199 = int_to_ptr.vmem [resolvable:$true] %s198
          %204 = dma.hbm_to_vmem [thread:$0]  %s197, 2048, %s199, %s186, 128, 128, 8
        $region24: #{_linear_impl.1} parent=19 // pred_fallthru
          _
        // Predicated region
        $region25: #{_linear_impl.1} parent=19 // pred_check
          %p205 = pneg %p111
        $region26: #{_linear_impl.1} parent=19 // pred_check_branch
          %207 = sbr.rel (%p205) target = $region28
        $region27: #{_linear_impl.1} parent=19 // pred_region
          %p208 = scmp.lt.s32.totalorder %s24, 1
          %s209 = scalar_select %p208, %s24, 1
          %s210 = scalar_lea.vmem %s2, %s209
        $region28: #{_linear_impl.1} parent=19 // pred_fallthru
          _
      $region20: #{_linear_impl.1} parent=5 // pred_fallthru
        _
      %p211 = scmp.le.s32.totalorder 1, %s16
      %p212 = scmp.lt.s32.totalorder %s16, 3
      %p213 = pnand %p211, %p212
      %p214 = pneg %p213
      // Predicated region
      $region29: #{_linear_impl.1} parent=5 // pred_check
        _
      $region30: #{_linear_impl.1} parent=5 // pred_check_branch
        %216 = sbr.rel (%p213) target = $region32
      $region31: #{_linear_impl.1} parent=5 // pred_region
        %s217 = ssub.s32 %s16, 1
        // Predicated region
        $region33: #{_linear_impl.1} parent=31 // pred_check
          %p218 = pneg %p63
        $region34: #{_linear_impl.1} parent=31 // pred_check_branch
          %220 = sbr.rel (%p218) target = $region36
        $region35: #{_linear_impl.1} parent=31 // pred_region
          %222 = dma.done [#allocation3], 256
        $region36: #{_linear_impl.1} parent=31 // pred_fallthru
          _
        %s223 = sand.u32 %s78, 1
        %s224 = scalar_lea.sflag [#allocation6], %s223
        %s225 = sand.u32 %s78, 1
        %s226 = smul.addr %s225, 128
        %s227 = scalar_lea.vmem [#allocation5], %s226
        // Predicated region
        $region37: #{_linear_impl.1} parent=31 // pred_check
          %p228 = pneg %p91
        $region38: #{_linear_impl.1} parent=31 // pred_check_branch
          %230 = sbr.rel (%p228) target = $region40
        $region39: #{_linear_impl.1} parent=31 // pred_region
          %232 = dma.done %s224, 2048
        $region40: #{_linear_impl.1} parent=31 // pred_fallthru
          _
        %p233 = pneg %p63
        %p234 = pneg %p60
        %s235 = sand.u32 %s78, 1
        %s236 = scalar_lea.sflag [#allocation6], %s235
        %s237 = sand.u32 %s78, 1
        %s238 = smul.addr %s237, 128
        %s239 = scalar_lea.vmem [#allocation5], %s238
        %p240 = pneg %p91
        %p241 = pneg %p88
        %p242 = scmp.lt.s32.totalorder %s27, 1
        %s243 = scalar_select %p242, %s27, 1
        %s244 = scalar_lea.vmem %s2, %s243
        %p245 = pneg %p117
        %p246 = pneg %p114
        %p247 = pneg %p145
        %p248 = pneg %p142
        %s249 = sand.u32 %s132, 1
        %s250 = scalar_lea.sflag [#allocation4], %s249
        %s251 = sand.u32 %s132, 1
        %s252 = smul.addr %s251, 16
        %s253 = scalar_lea.vmem [#allocation7], %s252
        %s254 = smul.u32 2, %s26
        %s255 = smul.u32 16, %s27
        %p256 = scmp.lt.s32.totalorder %s27, 1
        %s257 = scalar_select %p256, %s27, 1
        %s258 = scalar_lea.vmem %s2, %s257
        %s259 = smul.u32 2, %s26
        %v260 = vld [vmem:[#allocation2] sm:$0xff]
        %v261 = vld [vmem:[#allocation2 + $0x8] sm:$0xff]
        %v262 = vld [vmem:[%s227] sm:$0xff]
        %v263 = vld [vmem:[%s227 + $0x8] sm:$0xff]
        %v264 = vld [vmem:[%s227 + $0x10] sm:$0xff]
        %v265 = vld [vmem:[%s227 + $0x18] sm:$0xff]
        %v266 = vld [vmem:[%s227 + $0x20] sm:$0xff]
        %v267 = vld [vmem:[%s227 + $0x28] sm:$0xff]
        %v268 = vld [vmem:[%s227 + $0x30] sm:$0xff]
        %v269 = vld [vmem:[%s227 + $0x38] sm:$0xff]
        %v270 = vld [vmem:[%s227 + $0x40] sm:$0xff]
        %v271 = vld [vmem:[%s227 + $0x48] sm:$0xff]
        %v272 = vld [vmem:[%s227 + $0x50] sm:$0xff]
        %v273 = vld [vmem:[%s227 + $0x58] sm:$0xff]
        %v274 = vld [vmem:[%s227 + $0x60] sm:$0xff]
        %v275 = vld [vmem:[%s227 + $0x68] sm:$0xff]
        %v276 = vld [vmem:[%s227 + $0x70] sm:$0xff]
        %v277 = vld [vmem:[%s227 + $0x78] sm:$0xff]
        %278 = vmatpush.xpose.msra.mxu0 %v277
        %279 = vmatpush.xpose.msra.mxu0 %v276
        %280 = vmatpush.xpose.msra.mxu0 %v275
        %281 = vmatpush.xpose.msra.mxu0 %v274
        %282 = vmatpush.xpose.msra.mxu0 %v273
        %283 = vmatpush.xpose.msra.mxu0 %v272
        %284 = vmatpush.xpose.msra.mxu0 %v271
        %285 = vmatpush.xpose.msra.mxu0 %v270
        %286 = vmatpush.xpose.msra.mxu0 %v269
        %287 = vmatpush.xpose.msra.mxu0 %v268
        %288 = vmatpush.xpose.msra.mxu0 %v267
        %289 = vmatpush.xpose.msra.mxu0 %v266
        %290 = vmatpush.xpose.msra.mxu0 %v265
        %291 = vmatpush.xpose.msra.mxu0 %v264
        %292 = vmatpush.xpose.msra.mxu0 %v263
        %293 = vmatpush.xpose.msra.mxu0 %v262
        %294 = vmatmul.f32.gmra.mxu0 %v260
        %v295 = vpop.f32.mrf.mxu0
        %v296 = vadd.f32 0.0, %v295
        %297 = vmatmul.f32.gmra.mxu0 %v261
        %v298 = vpop.f32.mrf.mxu0
        %v299 = vadd.f32 0.0, %v298
        %300 = vdwg.mxu0
        %p301 = scmp.eq.s32.totalorder %s28, 0
        // Predicated region
        $region41: #{_linear_impl.1} parent=31 // pred_check
          %p302 = pneg %p301
        $region42: #{_linear_impl.1} parent=31 // pred_check_branch
          %304 = sbr.rel (%p302) target = $region44
        $region43: #{_linear_impl.1} parent=31 // pred_region
          %v305 = vld [vmem:[%s258] sm:$0x1]
          %v307 = vperm.slane %v305, 0
          %v309 = vadd.f32 %v296, %v307
          %v310 = vadd.f32 %v299, %v307
          %311 = vst [vmem:[%s253] sm:$0xff] %v309
          %312 = vst [vmem:[%s253 + $0x8] sm:$0xff] %v310
        $region44: #{_linear_impl.1} parent=31 // pred_fallthru
          _
        %p313 = scmp.gt.s32.totalorder %s28, 0
        // Predicated region
        $region45: #{_linear_impl.1} parent=31 // pred_check
          %p314 = pneg %p313
        $region46: #{_linear_impl.1} parent=31 // pred_check_branch
          %316 = sbr.rel (%p314) target = $region48
        $region47: #{_linear_impl.1} parent=31 // pred_region
          %v317 = vld [vmem:[%s253] sm:$0xff]
          %v318 = vld [vmem:[%s253 + $0x8] sm:$0xff]
          %v319 = vadd.f32 %v317, %v296
          %v320 = vadd.f32 %v318, %v299
          %321 = vst [vmem:[%s253] sm:$0xff] %v319
          %322 = vst [vmem:[%s253 + $0x8] sm:$0xff] %v320
        $region48: #{_linear_impl.1} parent=31 // pred_fallthru
          _
        %s323 = sand.u32 %s132, 1
        %s324 = scalar_lea.sflag [#allocation4], %s323
        %s325 = sand.u32 %s132, 1
        %s326 = smul.addr %s325, 16
        %s327 = scalar_lea.vmem [#allocation7], %s326
        // Predicated region
        $region49: #{_linear_impl.1} parent=31 // pred_check
          %p328 = pneg %p142
        $region50: #{_linear_impl.1} parent=31 // pred_check_branch
          %330 = sbr.rel (%p328) target = $region52
        $region51: #{_linear_impl.1} parent=31 // pred_region
          %s331 = smul.u32 2, %s26
          %333 = vsyncadd %s324, 0
          %s334 = smul.addr %s331, 2
          %s335 = sadd.s32 %s27, %s334
          %s336 = smul.addr %s335, 8
          %s337 = scalar_lea.hbm %s3, %s336
          %s338 = sshll.u32 %s327, 4
          %s339 = int_to_ptr.vmem [resolvable:$true] %s338
          %s340 = sshll.u32 %s337, 4
          %s341 = int_to_ptr.hbm [resolvable:$true] %s340
          %346 = dma.vmem_to_hbm [thread:$0]  %s339, 256, %s341, %s324, 128, 256, 8
        $region52: #{_linear_impl.1} parent=31 // pred_fallthru
          _
      $region32: #{_linear_impl.1} parent=5 // pred_fallthru
        _
      %p347 = scmp.le.s32.totalorder 2, %s16
      // Predicated region
      $region53: #{_linear_impl.1} parent=5 // pred_check
        %p348 = pneg %p347
      $region54: #{_linear_impl.1} parent=5 // pred_check_branch
        %350 = sbr.rel (%p348) target = $region56
      $region55: #{_linear_impl.1} parent=5 // pred_region
        %s351 = ssub.s32 %s16, 2
        // Predicated region
        $region57: #{_linear_impl.1} parent=55 // pred_check
          %p352 = pneg %p148
        $region58: #{_linear_impl.1} parent=55 // pred_check_branch
          %354 = sbr.rel (%p352) target = $region60
        $region59: #{_linear_impl.1} parent=55 // pred_region
          %s355 = sand.u32 %s133, 1
          %s356 = scalar_lea.sflag [#allocation4], %s355
          %s357 = sand.u32 %s133, 1
          %s358 = smul.addr %s357, 16
          %s359 = scalar_lea.vmem [#allocation7], %s358
          %361 = dma.done %s356, 256
        $region60: #{_linear_impl.1} parent=55 // pred_fallthru
          _
      $region56: #{_linear_impl.1} parent=5 // pred_fallthru
        _
    $region6: #{_linear_impl.1} parent=1 // loop_footer
      %s20 = sadd.s32 1, %s16
    $region7: #{_linear_impl.1} parent=1 // loop_footer_branch
      %15 = sbr.rel target = $region3
    $region8: #{_linear_impl.1} parent=1 // loop_exit
      _
    %362 = vsyncpa [#allocation3], 1
    %s363 = scalar_lea.sflag [#allocation3], 1
    %364 = vsyncpa %s363, 1
    %365 = vsyncpa [#allocation6], 1
    %s366 = scalar_lea.sflag [#allocation6], 1
    %367 = vsyncpa %s366, 1
    %368 = vsyncpa [#allocation4], 1
    %s369 = scalar_lea.sflag [#allocation4], 1
    %370 = vsyncpa %s369, 1

</llo_original>
